<compile_context>
chip_gen: v5e
topology: v5e:2x2
jax: 0.10.0
libtpu: 0.0.40
codegen_flags: <defaults>
</compile_context>

<pallas_src>
import functools

import jax
import jax.numpy as jnp
from jax.experimental import pallas as pl
from jax.experimental.pallas import tpu as pltpu


def _lstm_linear_kernel(x_ref, wcomb_ref, bcomb_ref, wih_ref, whh_ref, bl_ref,
                        wdec_ref, bdec_ref, out_ref, hid_scr,
                        *, seq_len, pred_len, hidden, bp):
    S, P, H, BP = seq_len, pred_len, hidden, bp

    # Recurrent-matmul operands in bf16: one MXU pass per step instead of f32
    # pass-splitting; accumulation stays f32 via preferred_element_type.
    wih = wih_ref[...].astype(jnp.bfloat16)      # (H, 4H)  (transposed weight_ih)
    whh = whh_ref[...].astype(jnp.bfloat16)      # (H, 4H)  (transposed weight_hh)
    bl = bl_ref[...]                             # (1, 4H)  (b_ih + b_hh)

    # ---- hoisted prologue: encoder Linear folded into the x-side LSTM gate
    #      projection for ALL S steps in a single MXU call.  The result
    #      ((S*BP, 4H) f32 = 8 vregs) stays in vregs -- no scratch round-trip.
    gates = jnp.dot(x_ref[...], wcomb_ref[...],
                    preferred_element_type=jnp.float32) + bcomb_ref[...]

    def act(g):
        sg = jax.nn.sigmoid(g)                   # one full-vreg EUP pass (i,f,o)
        i_g = sg[:, 0:H]
        f_g = sg[:, H:2 * H]
        o_g = sg[:, 3 * H:4 * H]
        g_g = jnp.tanh(g[:, 2 * H:3 * H])
        return i_g, f_g, o_g, g_g

    # ---- t = 0: zero initial state  =>  h @ W_hh and the f-gate are dead.
    #      The t=0 hidden state is dropped by the model, so it is never stored.
    i_g, _, o_g, g_g = act(gates[0:BP, :])
    c = i_g * g_g
    h = o_g * jnp.tanh(c)

    # ---- encoder LSTM, steps 1..S-1 (fully unrolled Python loop: static gate
    #      slices out of vregs, only h @ W_hh on the recurrent critical path).
    for t in range(1, S):
        g = gates[t * BP:(t + 1) * BP, :] + jnp.dot(
            h.astype(jnp.bfloat16), whh, preferred_element_type=jnp.float32)
        i_g, f_g, o_g, g_g = act(g)
        c = f_g * c + i_g * g_g
        h = o_g * jnp.tanh(c)
        hid_scr[pl.ds((t - 1) * BP, BP), :] = h

    # ---- autoregressive prediction: the PyTorch loop calls self.Lstm(h) with
    #      NO initial state, so (h0, c0) == 0  =>  h @ W_hh and the f-gate are
    #      dead:  c_new = i * g,  h_new = o * tanh(c_new).
    for i in range(P):
        g = jnp.dot(h.astype(jnp.bfloat16), wih,
                    preferred_element_type=jnp.float32) + bl
        i_g, _, o_g, g_g = act(g)
        h = o_g * jnp.tanh(i_g * g_g)
        hid_scr[pl.ds((S - 1 + i) * BP, BP), :] = h

    # ---- decoder Linear: one batched matmul + one store over the S-1+P kept
    #      timesteps (t=0 already dropped by construction; batch padding is
    #      stripped in the wrapper).
    out_ref[...] = jnp.dot(hid_scr[...], wdec_ref[...],
                           preferred_element_type=jnp.float32) + bdec_ref[...]


@functools.partial(jax.jit, static_argnames=("pred_len",))
def model_forward(x, params, *, pred_len):
    """x: (B, S, C) float32 (PyTorch batch-first). Returns (B, S-1+pred_len, C)."""
    B, S, C = x.shape
    H = params["w_ih"].shape[0]
    P = pred_len
    BP = max(8, ((B + 7) // 8) * 8)      # pad batch to full sublane groups
    T = S - 1 + P                        # kept timesteps (t=0 dropped in-kernel)

    x_t = jnp.transpose(x.astype(jnp.float32), (1, 0, 2))          # (S, B, C)
    x2 = jnp.pad(x_t, ((0, 0), (0, BP - B), (0, 0))).reshape(S * BP, C)

    # Fold the encoder Linear into the LSTM input projection (composition of
    # linear maps): gates_pre = x @ (w_enc @ w_ih) + (b_enc @ w_ih + b_lstm).
    w_comb = params["w_enc"] @ params["w_ih"]                       # (C, 4H)
    b_comb = params["b_enc"] @ params["w_ih"] + params["b_lstm"]    # (1, 4H)

    kernel = functools.partial(_lstm_linear_kernel,
                               seq_len=S, pred_len=P, hidden=H, bp=BP)

    vmem = pl.BlockSpec(memory_space=pltpu.MemorySpace.VMEM)
    out2 = pl.pallas_call(
        kernel,
        out_shape=jax.ShapeDtypeStruct((T * BP, C), jnp.float32),
        in_specs=[vmem] * 8,
        out_specs=vmem,
        scratch_shapes=[
            pltpu.VMEM((T * BP, H), jnp.float32),      # kept hidden states
        ],
    )(x2, w_comb, b_comb, params["w_ih"], params["w_hh"],
      params["b_lstm"], params["w_dec"], params["b_dec"])

    out = out2.reshape(T, BP, C)[:, :B, :]             # strip batch padding
    return jnp.transpose(out, (1, 0, 2))               # (B, S-1+P, C)


def init_params(key, channels, hidden):
    """Deterministic PyTorch-style uniform init (synthetic weights)."""
    ks = jax.random.split(key, 8)

    def u(k, shape, fan):
        bound = 1.0 / jnp.sqrt(jnp.float32(fan))
        return jax.random.uniform(k, shape, jnp.float32, -bound, bound)

    w_enc = u(ks[0], (channels, hidden), channels)        # Linear_encoder.weight^T
    b_enc = u(ks[1], (1, hidden), channels)
    w_ih = u(ks[2], (hidden, 4 * hidden), hidden)         # LSTM.weight_ih^T
    w_hh = u(ks[3], (hidden, 4 * hidden), hidden)         # LSTM.weight_hh^T
    b_ih = u(ks[4], (1, 4 * hidden), hidden)
    b_hh = u(ks[5], (1, 4 * hidden), hidden)
    w_dec = u(ks[6], (hidden, channels), hidden)          # Linear_decoder.weight^T
    b_dec = u(ks[7], (1, channels), hidden)
    return dict(w_enc=w_enc, b_enc=b_enc, w_ih=w_ih, w_hh=w_hh,
                b_lstm=b_ih + b_hh, w_dec=w_dec, b_dec=b_dec)


def reference_forward(x, p, pred_len):
    """Pure-JAX reference mirroring the PyTorch forward, for verification."""
    B, S, C = x.shape
    H = p["w_enc"].shape[1]
    xe = jnp.einsum("bsc,ch->bsh", x, p["w_enc"]) + p["b_enc"][0]

    def cell(xt, h, c):
        g = xt @ p["w_ih"] + h @ p["w_hh"] + p["b_lstm"][0]
        i = jax.nn.sigmoid(g[:, :H])
        f = jax.nn.sigmoid(g[:, H:2 * H])
        gg = jnp.tanh(g[:, 2 * H:3 * H])
        o = jax.nn.sigmoid(g[:, 3 * H:])
        c = f * c + i * gg
        return o * jnp.tanh(c), c

    h = jnp.zeros((B, H), jnp.float32)
    c = jnp.zeros((B, H), jnp.float32)
    outs = []
    for t in range(S):
        h, c = cell(xe[:, t, :], h, c)
        outs.append(h)
    for _ in range(pred_len):
        h, _ = cell(h, jnp.zeros((B, H)), jnp.zeros((B, H)))  # zero initial state
        outs.append(h)
    hid = jnp.stack(outs, axis=1)[:, 1:, :]
    return jnp.einsum("bth,hc->btc", hid, p["w_dec"]) + p["b_dec"][0]


if __name__ == "__main__":
    # Small config: batch=2, seq_len=8, enc_in(channels)=4, hidden_size=32, pred_len=4
    B, S, C, H, P = 2, 8, 4, 32, 4

    key = jax.random.PRNGKey(0)
    kx, kp = jax.random.split(key)
    x = jax.random.normal(kx, (B, S, C), jnp.float32)
    params = init_params(kp, C, H)

    out = jax.block_until_ready(model_forward(x, params, pred_len=P))
    assert out.shape == (B, S - 1 + P, C), out.shape

    ref = jax.block_until_ready(reference_forward(x, params, P))
    assert jnp.all(jnp.isfinite(out))
    assert jnp.allclose(out, ref, atol=1e-2, rtol=1e-2), (
        float(jnp.max(jnp.abs(out - ref))))

    print("KERNEL_OK")
</pallas_src>

<mosaic_0001>
module attributes {stable_mosaic.version = 11 : i64} {
  func.func @_lstm_linear_kernel(%arg0: memref<64x4xf32, #tpu.memory_space<vmem>>, %arg1: memref<4x128xf32, #tpu.memory_space<vmem>>, %arg2: memref<1x128xf32, #tpu.memory_space<vmem>>, %arg3: memref<32x128xf32, #tpu.memory_space<vmem>>, %arg4: memref<32x128xf32, #tpu.memory_space<vmem>>, %arg5: memref<1x128xf32, #tpu.memory_space<vmem>>, %arg6: memref<32x4xf32, #tpu.memory_space<vmem>>, %arg7: memref<1x4xf32, #tpu.memory_space<vmem>>, %arg8: memref<88x4xf32, #tpu.memory_space<vmem>>, %arg9: memref<88x32xf32, #tpu.memory_space<vmem>>) attributes {dimension_semantics = [], scalar_prefetch = 0 : i64, scratch_operands = 1 : i64, tpu.core_type = #tpu.core_type<tc>} {
    %c0 = arith.constant 0 : index
    %c0_0 = arith.constant 0 : index
    %0 = vector.load %arg3[%c0, %c0_0] : memref<32x128xf32, #tpu.memory_space<vmem>>, vector<32x128xf32>
    %1 = arith.truncf %0 : vector<32x128xf32> to vector<32x128xbf16>
    %c0_1 = arith.constant 0 : index
    %c0_2 = arith.constant 0 : index
    %2 = vector.load %arg4[%c0_1, %c0_2] : memref<32x128xf32, #tpu.memory_space<vmem>>, vector<32x128xf32>
    %3 = arith.truncf %2 : vector<32x128xf32> to vector<32x128xbf16>
    %c0_3 = arith.constant 0 : index
    %c0_4 = arith.constant 0 : index
    %4 = vector.load %arg5[%c0_3, %c0_4] : memref<1x128xf32, #tpu.memory_space<vmem>>, vector<1x128xf32>
    %c0_5 = arith.constant 0 : index
    %c0_6 = arith.constant 0 : index
    %5 = vector.load %arg0[%c0_5, %c0_6] : memref<64x4xf32, #tpu.memory_space<vmem>>, vector<64x4xf32>
    %c0_7 = arith.constant 0 : index
    %c0_8 = arith.constant 0 : index
    %6 = vector.load %arg1[%c0_7, %c0_8] : memref<4x128xf32, #tpu.memory_space<vmem>>, vector<4x128xf32>
    %cst = arith.constant dense<0.000000e+00> : vector<64x128xf32>
    %7 = tpu.matmul %5, %6, %cst {dimension_numbers = #tpu.dot_dimension_numbers<[1], [0], [0], [1], [0, 0, 1, 1], [], []>} : vector<64x4xf32>, vector<4x128xf32>, vector<64x128xf32> -> vector<64x128xf32>
    %c0_9 = arith.constant 0 : index
    %c0_10 = arith.constant 0 : index
    %8 = vector.load %arg2[%c0_9, %c0_10] : memref<1x128xf32, #tpu.memory_space<vmem>>, vector<1x128xf32>
    %9 = vector.broadcast %8 : vector<1x128xf32> to vector<64x128xf32>
    %10 = arith.addf %7, %9 : vector<64x128xf32>
    %11 = vector.extract_strided_slice %10 {offsets = [0, 0], sizes = [8, 128], strides = [1, 1]} : vector<64x128xf32> to vector<8x128xf32>
    %12 = arith.negf %11 : vector<8x128xf32>
    %13 = math.exp %12 : vector<8x128xf32>
    %cst_11 = arith.constant 1.000000e+00 : f32
    %14 = vector.broadcast %cst_11 : f32 to vector<8x128xf32>
    %15 = arith.addf %14, %13 : vector<8x128xf32>
    %16 = arith.divf %14, %15 : vector<8x128xf32>
    %17 = vector.extract_strided_slice %16 {offsets = [0, 0], sizes = [8, 32], strides = [1, 1]} : vector<8x128xf32> to vector<8x32xf32>
    %18 = vector.extract_strided_slice %16 {offsets = [0, 96], sizes = [8, 32], strides = [1, 1]} : vector<8x128xf32> to vector<8x32xf32>
    %19 = vector.extract_strided_slice %11 {offsets = [0, 64], sizes = [8, 32], strides = [1, 1]} : vector<8x128xf32> to vector<8x32xf32>
    %20 = math.tanh %19 : vector<8x32xf32>
    %21 = arith.mulf %17, %20 : vector<8x32xf32>
    %22 = math.tanh %21 : vector<8x32xf32>
    %23 = arith.mulf %18, %22 : vector<8x32xf32>
    %24 = vector.extract_strided_slice %10 {offsets = [8, 0], sizes = [8, 128], strides = [1, 1]} : vector<64x128xf32> to vector<8x128xf32>
    %25 = arith.truncf %23 : vector<8x32xf32> to vector<8x32xbf16>
    %cst_12 = arith.constant dense<0.000000e+00> : vector<8x128xf32>
    %26 = tpu.matmul %25, %3, %cst_12 {dimension_numbers = #tpu.dot_dimension_numbers<[1], [0], [0], [1], [0, 0, 1, 1], [], []>} : vector<8x32xbf16>, vector<32x128xbf16>, vector<8x128xf32> -> vector<8x128xf32>
    %27 = arith.addf %24, %26 : vector<8x128xf32>
    %28 = arith.negf %27 : vector<8x128xf32>
    %29 = math.exp %28 : vector<8x128xf32>
    %cst_13 = arith.constant 1.000000e+00 : f32
    %30 = vector.broadcast %cst_13 : f32 to vector<8x128xf32>
    %31 = arith.addf %30, %29 : vector<8x128xf32>
    %32 = arith.divf %30, %31 : vector<8x128xf32>
    %33 = vector.extract_strided_slice %32 {offsets = [0, 0], sizes = [8, 32], strides = [1, 1]} : vector<8x128xf32> to vector<8x32xf32>
    %34 = vector.extract_strided_slice %32 {offsets = [0, 32], sizes = [8, 32], strides = [1, 1]} : vector<8x128xf32> to vector<8x32xf32>
    %35 = vector.extract_strided_slice %32 {offsets = [0, 96], sizes = [8, 32], strides = [1, 1]} : vector<8x128xf32> to vector<8x32xf32>
    %36 = vector.extract_strided_slice %27 {offsets = [0, 64], sizes = [8, 32], strides = [1, 1]} : vector<8x128xf32> to vector<8x32xf32>
    %37 = math.tanh %36 : vector<8x32xf32>
    %38 = arith.mulf %34, %21 : vector<8x32xf32>
    %39 = arith.mulf %33, %37 : vector<8x32xf32>
    %40 = arith.addf %38, %39 : vector<8x32xf32>
    %41 = math.tanh %40 : vector<8x32xf32>
    %42 = arith.mulf %35, %41 : vector<8x32xf32>
    %c0_14 = arith.constant 0 : index
    %c0_15 = arith.constant 0 : index
    %43 = vector.load %arg9[%c0_14, %c0_15] : memref<88x32xf32, #tpu.memory_space<vmem>>, vector<8x32xf32>
    tpu.vector_store %arg9[%c0_14, %c0_15], %42 {strides = array<i32>} : memref<88x32xf32, #tpu.memory_space<vmem>>, vector<8x32xf32>,
    %44 = vector.extract_strided_slice %10 {offsets = [16, 0], sizes = [8, 128], strides = [1, 1]} : vector<64x128xf32> to vector<8x128xf32>
    %45 = arith.truncf %42 : vector<8x32xf32> to vector<8x32xbf16>
    %cst_16 = arith.constant dense<0.000000e+00> : vector<8x128xf32>
    %46 = tpu.matmul %45, %3, %cst_16 {dimension_numbers = #tpu.dot_dimension_numbers<[1], [0], [0], [1], [0, 0, 1, 1], [], []>} : vector<8x32xbf16>, vector<32x128xbf16>, vector<8x128xf32> -> vector<8x128xf32>
    %47 = arith.addf %44, %46 : vector<8x128xf32>
    %48 = arith.negf %47 : vector<8x128xf32>
    %49 = math.exp %48 : vector<8x128xf32>
    %cst_17 = arith.constant 1.000000e+00 : f32
    %50 = vector.broadcast %cst_17 : f32 to vector<8x128xf32>
    %51 = arith.addf %50, %49 : vector<8x128xf32>
    %52 = arith.divf %50, %51 : vector<8x128xf32>
    %53 = vector.extract_strided_slice %52 {offsets = [0, 0], sizes = [8, 32], strides = [1, 1]} : vector<8x128xf32> to vector<8x32xf32>
    %54 = vector.extract_strided_slice %52 {offsets = [0, 32], sizes = [8, 32], strides = [1, 1]} : vector<8x128xf32> to vector<8x32xf32>
    %55 = vector.extract_strided_slice %52 {offsets = [0, 96], sizes = [8, 32], strides = [1, 1]} : vector<8x128xf32> to vector<8x32xf32>
    %56 = vector.extract_strided_slice %47 {offsets = [0, 64], sizes = [8, 32], strides = [1, 1]} : vector<8x128xf32> to vector<8x32xf32>
    %57 = math.tanh %56 : vector<8x32xf32>
    %58 = arith.mulf %54, %40 : vector<8x32xf32>
    %59 = arith.mulf %53, %57 : vector<8x32xf32>
    %60 = arith.addf %58, %59 : vector<8x32xf32>
    %61 = math.tanh %60 : vector<8x32xf32>
    %62 = arith.mulf %55, %61 : vector<8x32xf32>
    %c8 = arith.constant 8 : index
    %c0_18 = arith.constant 0 : index
    %63 = vector.load %arg9[%c8, %c0_18] : memref<88x32xf32, #tpu.memory_space<vmem>>, vector<8x32xf32>
    tpu.vector_store %arg9[%c8, %c0_18], %62 {strides = array<i32>} : memref<88x32xf32, #tpu.memory_space<vmem>>, vector<8x32xf32>,
    %64 = vector.extract_strided_slice %10 {offsets = [24, 0], sizes = [8, 128], strides = [1, 1]} : vector<64x128xf32> to vector<8x128xf32>
    %65 = arith.truncf %62 : vector<8x32xf32> to vector<8x32xbf16>
    %cst_19 = arith.constant dense<0.000000e+00> : vector<8x128xf32>
    %66 = tpu.matmul %65, %3, %cst_19 {dimension_numbers = #tpu.dot_dimension_numbers<[1], [0], [0], [1], [0, 0, 1, 1], [], []>} : vector<8x32xbf16>, vector<32x128xbf16>, vector<8x128xf32> -> vector<8x128xf32>
    %67 = arith.addf %64, %66 : vector<8x128xf32>
    %68 = arith.negf %67 : vector<8x128xf32>
    %69 = math.exp %68 : vector<8x128xf32>
    %cst_20 = arith.constant 1.000000e+00 : f32
    %70 = vector.broadcast %cst_20 : f32 to vector<8x128xf32>
    %71 = arith.addf %70, %69 : vector<8x128xf32>
    %72 = arith.divf %70, %71 : vector<8x128xf32>
    %73 = vector.extract_strided_slice %72 {offsets = [0, 0], sizes = [8, 32], strides = [1, 1]} : vector<8x128xf32> to vector<8x32xf32>
    %74 = vector.extract_strided_slice %72 {offsets = [0, 32], sizes = [8, 32], strides = [1, 1]} : vector<8x128xf32> to vector<8x32xf32>
    %75 = vector.extract_strided_slice %72 {offsets = [0, 96], sizes = [8, 32], strides = [1, 1]} : vector<8x128xf32> to vector<8x32xf32>
    %76 = vector.extract_strided_slice %67 {offsets = [0, 64], sizes = [8, 32], strides = [1, 1]} : vector<8x128xf32> to vector<8x32xf32>
    %77 = math.tanh %76 : vector<8x32xf32>
    %78 = arith.mulf %74, %60 : vector<8x32xf32>
    %79 = arith.mulf %73, %77 : vector<8x32xf32>
    %80 = arith.addf %78, %79 : vector<8x32xf32>
    %81 = math.tanh %80 : vector<8x32xf32>
    %82 = arith.mulf %75, %81 : vector<8x32xf32>
    %c16 = arith.constant 16 : index
    %c0_21 = arith.constant 0 : index
    %83 = vector.load %arg9[%c16, %c0_21] : memref<88x32xf32, #tpu.memory_space<vmem>>, vector<8x32xf32>
    tpu.vector_store %arg9[%c16, %c0_21], %82 {strides = array<i32>} : memref<88x32xf32, #tpu.memory_space<vmem>>, vector<8x32xf32>,
    %84 = vector.extract_strided_slice %10 {offsets = [32, 0], sizes = [8, 128], strides = [1, 1]} : vector<64x128xf32> to vector<8x128xf32>
    %85 = arith.truncf %82 : vector<8x32xf32> to vector<8x32xbf16>
    %cst_22 = arith.constant dense<0.000000e+00> : vector<8x128xf32>
    %86 = tpu.matmul %85, %3, %cst_22 {dimension_numbers = #tpu.dot_dimension_numbers<[1], [0], [0], [1], [0, 0, 1, 1], [], []>} : vector<8x32xbf16>, vector<32x128xbf16>, vector<8x128xf32> -> vector<8x128xf32>
    %87 = arith.addf %84, %86 : vector<8x128xf32>
    %88 = arith.negf %87 : vector<8x128xf32>
    %89 = math.exp %88 : vector<8x128xf32>
    %cst_23 = arith.constant 1.000000e+00 : f32
    %90 = vector.broadcast %cst_23 : f32 to vector<8x128xf32>
    %91 = arith.addf %90, %89 : vector<8x128xf32>
    %92 = arith.divf %90, %91 : vector<8x128xf32>
    %93 = vector.extract_strided_slice %92 {offsets = [0, 0], sizes = [8, 32], strides = [1, 1]} : vector<8x128xf32> to vector<8x32xf32>
    %94 = vector.extract_strided_slice %92 {offsets = [0, 32], sizes = [8, 32], strides = [1, 1]} : vector<8x128xf32> to vector<8x32xf32>
    %95 = vector.extract_strided_slice %92 {offsets = [0, 96], sizes = [8, 32], strides = [1, 1]} : vector<8x128xf32> to vector<8x32xf32>
    %96 = vector.extract_strided_slice %87 {offsets = [0, 64], sizes = [8, 32], strides = [1, 1]} : vector<8x128xf32> to vector<8x32xf32>
    %97 = math.tanh %96 : vector<8x32xf32>
    %98 = arith.mulf %94, %80 : vector<8x32xf32>
    %99 = arith.mulf %93, %97 : vector<8x32xf32>
    %100 = arith.addf %98, %99 : vector<8x32xf32>
    %101 = math.tanh %100 : vector<8x32xf32>
    %102 = arith.mulf %95, %101 : vector<8x32xf32>
    %c24 = arith.constant 24 : index
    %c0_24 = arith.constant 0 : index
    %103 = vector.load %arg9[%c24, %c0_24] : memref<88x32xf32, #tpu.memory_space<vmem>>, vector<8x32xf32>
    tpu.vector_store %arg9[%c24, %c0_24], %102 {strides = array<i32>} : memref<88x32xf32, #tpu.memory_space<vmem>>, vector<8x32xf32>,
    %104 = vector.extract_strided_slice %10 {offsets = [40, 0], sizes = [8, 128], strides = [1, 1]} : vector<64x128xf32> to vector<8x128xf32>
    %105 = arith.truncf %102 : vector<8x32xf32> to vector<8x32xbf16>
    %cst_25 = arith.constant dense<0.000000e+00> : vector<8x128xf32>
    %106 = tpu.matmul %105, %3, %cst_25 {dimension_numbers = #tpu.dot_dimension_numbers<[1], [0], [0], [1], [0, 0, 1, 1], [], []>} : vector<8x32xbf16>, vector<32x128xbf16>, vector<8x128xf32> -> vector<8x128xf32>
    %107 = arith.addf %104, %106 : vector<8x128xf32>
    %108 = arith.negf %107 : vector<8x128xf32>
    %109 = math.exp %108 : vector<8x128xf32>
    %cst_26 = arith.constant 1.000000e+00 : f32
    %110 = vector.broadcast %cst_26 : f32 to vector<8x128xf32>
    %111 = arith.addf %110, %109 : vector<8x128xf32>
    %112 = arith.divf %110, %111 : vector<8x128xf32>
    %113 = vector.extract_strided_slice %112 {offsets = [0, 0], sizes = [8, 32], strides = [1, 1]} : vector<8x128xf32> to vector<8x32xf32>
    %114 = vector.extract_strided_slice %112 {offsets = [0, 32], sizes = [8, 32], strides = [1, 1]} : vector<8x128xf32> to vector<8x32xf32>
    %115 = vector.extract_strided_slice %112 {offsets = [0, 96], sizes = [8, 32], strides = [1, 1]} : vector<8x128xf32> to vector<8x32xf32>
    %116 = vector.extract_strided_slice %107 {offsets = [0, 64], sizes = [8, 32], strides = [1, 1]} : vector<8x128xf32> to vector<8x32xf32>
    %117 = math.tanh %116 : vector<8x32xf32>
    %118 = arith.mulf %114, %100 : vector<8x32xf32>
    %119 = arith.mulf %113, %117 : vector<8x32xf32>
    %120 = arith.addf %118, %119 : vector<8x32xf32>
    %121 = math.tanh %120 : vector<8x32xf32>
    %122 = arith.mulf %115, %121 : vector<8x32xf32>
    %c32 = arith.constant 32 : index
    %c0_27 = arith.constant 0 : index
    %123 = vector.load %arg9[%c32, %c0_27] : memref<88x32xf32, #tpu.memory_space<vmem>>, vector<8x32xf32>
    tpu.vector_store %arg9[%c32, %c0_27], %122 {strides = array<i32>} : memref<88x32xf32, #tpu.memory_space<vmem>>, vector<8x32xf32>,
    %124 = vector.extract_strided_slice %10 {offsets = [48, 0], sizes = [8, 128], strides = [1, 1]} : vector<64x128xf32> to vector<8x128xf32>
    %125 = arith.truncf %122 : vector<8x32xf32> to vector<8x32xbf16>
    %cst_28 = arith.constant dense<0.000000e+00> : vector<8x128xf32>
    %126 = tpu.matmul %125, %3, %cst_28 {dimension_numbers = #tpu.dot_dimension_numbers<[1], [0], [0], [1], [0, 0, 1, 1], [], []>} : vector<8x32xbf16>, vector<32x128xbf16>, vector<8x128xf32> -> vector<8x128xf32>
    %127 = arith.addf %124, %126 : vector<8x128xf32>
    %128 = arith.negf %127 : vector<8x128xf32>
    %129 = math.exp %128 : vector<8x128xf32>
    %cst_29 = arith.constant 1.000000e+00 : f32
    %130 = vector.broadcast %cst_29 : f32 to vector<8x128xf32>
    %131 = arith.addf %130, %129 : vector<8x128xf32>
    %132 = arith.divf %130, %131 : vector<8x128xf32>
    %133 = vector.extract_strided_slice %132 {offsets = [0, 0], sizes = [8, 32], strides = [1, 1]} : vector<8x128xf32> to vector<8x32xf32>
    %134 = vector.extract_strided_slice %132 {offsets = [0, 32], sizes = [8, 32], strides = [1, 1]} : vector<8x128xf32> to vector<8x32xf32>
    %135 = vector.extract_strided_slice %132 {offsets = [0, 96], sizes = [8, 32], strides = [1, 1]} : vector<8x128xf32> to vector<8x32xf32>
    %136 = vector.extract_strided_slice %127 {offsets = [0, 64], sizes = [8, 32], strides = [1, 1]} : vector<8x128xf32> to vector<8x32xf32>
    %137 = math.tanh %136 : vector<8x32xf32>
    %138 = arith.mulf %134, %120 : vector<8x32xf32>
    %139 = arith.mulf %133, %137 : vector<8x32xf32>
    %140 = arith.addf %138, %139 : vector<8x32xf32>
    %141 = math.tanh %140 : vector<8x32xf32>
    %142 = arith.mulf %135, %141 : vector<8x32xf32>
    %c40 = arith.constant 40 : index
    %c0_30 = arith.constant 0 : index
    %143 = vector.load %arg9[%c40, %c0_30] : memref<88x32xf32, #tpu.memory_space<vmem>>, vector<8x32xf32>
    tpu.vector_store %arg9[%c40, %c0_30], %142 {strides = array<i32>} : memref<88x32xf32, #tpu.memory_space<vmem>>, vector<8x32xf32>,
    %144 = vector.extract_strided_slice %10 {offsets = [56, 0], sizes = [8, 128], strides = [1, 1]} : vector<64x128xf32> to vector<8x128xf32>
    %145 = arith.truncf %142 : vector<8x32xf32> to vector<8x32xbf16>
    %cst_31 = arith.constant dense<0.000000e+00> : vector<8x128xf32>
    %146 = tpu.matmul %145, %3, %cst_31 {dimension_numbers = #tpu.dot_dimension_numbers<[1], [0], [0], [1], [0, 0, 1, 1], [], []>} : vector<8x32xbf16>, vector<32x128xbf16>, vector<8x128xf32> -> vector<8x128xf32>
    %147 = arith.addf %144, %146 : vector<8x128xf32>
    %148 = arith.negf %147 : vector<8x128xf32>
    %149 = math.exp %148 : vector<8x128xf32>
    %cst_32 = arith.constant 1.000000e+00 : f32
    %150 = vector.broadcast %cst_32 : f32 to vector<8x128xf32>
    %151 = arith.addf %150, %149 : vector<8x128xf32>
    %152 = arith.divf %150, %151 : vector<8x128xf32>
    %153 = vector.extract_strided_slice %152 {offsets = [0, 0], sizes = [8, 32], strides = [1, 1]} : vector<8x128xf32> to vector<8x32xf32>
    %154 = vector.extract_strided_slice %152 {offsets = [0, 32], sizes = [8, 32], strides = [1, 1]} : vector<8x128xf32> to vector<8x32xf32>
    %155 = vector.extract_strided_slice %152 {offsets = [0, 96], sizes = [8, 32], strides = [1, 1]} : vector<8x128xf32> to vector<8x32xf32>
    %156 = vector.extract_strided_slice %147 {offsets = [0, 64], sizes = [8, 32], strides = [1, 1]} : vector<8x128xf32> to vector<8x32xf32>
    %157 = math.tanh %156 : vector<8x32xf32>
    %158 = arith.mulf %154, %140 : vector<8x32xf32>
    %159 = arith.mulf %153, %157 : vector<8x32xf32>
    %160 = arith.addf %158, %159 : vector<8x32xf32>
    %161 = math.tanh %160 : vector<8x32xf32>
    %162 = arith.mulf %155, %161 : vector<8x32xf32>
    %c48 = arith.constant 48 : index
    %c0_33 = arith.constant 0 : index
    %163 = vector.load %arg9[%c48, %c0_33] : memref<88x32xf32, #tpu.memory_space<vmem>>, vector<8x32xf32>
    tpu.vector_store %arg9[%c48, %c0_33], %162 {strides = array<i32>} : memref<88x32xf32, #tpu.memory_space<vmem>>, vector<8x32xf32>,
    %164 = arith.truncf %162 : vector<8x32xf32> to vector<8x32xbf16>
    %cst_34 = arith.constant dense<0.000000e+00> : vector<8x128xf32>
    %165 = tpu.matmul %164, %1, %cst_34 {dimension_numbers = #tpu.dot_dimension_numbers<[1], [0], [0], [1], [0, 0, 1, 1], [], []>} : vector<8x32xbf16>, vector<32x128xbf16>, vector<8x128xf32> -> vector<8x128xf32>
    %166 = vector.broadcast %4 : vector<1x128xf32> to vector<8x128xf32>
    %167 = arith.addf %165, %166 : vector<8x128xf32>
    %168 = arith.negf %167 : vector<8x128xf32>
    %169 = math.exp %168 : vector<8x128xf32>
    %cst_35 = arith.constant 1.000000e+00 : f32
    %170 = vector.broadcast %cst_35 : f32 to vector<8x128xf32>
    %171 = arith.addf %170, %169 : vector<8x128xf32>
    %172 = arith.divf %170, %171 : vector<8x128xf32>
    %173 = vector.extract_strided_slice %172 {offsets = [0, 0], sizes = [8, 32], strides = [1, 1]} : vector<8x128xf32> to vector<8x32xf32>
    %174 = vector.extract_strided_slice %172 {offsets = [0, 96], sizes = [8, 32], strides = [1, 1]} : vector<8x128xf32> to vector<8x32xf32>
    %175 = vector.extract_strided_slice %167 {offsets = [0, 64], sizes = [8, 32], strides = [1, 1]} : vector<8x128xf32> to vector<8x32xf32>
    %176 = math.tanh %175 : vector<8x32xf32>
    %177 = arith.mulf %173, %176 : vector<8x32xf32>
    %178 = math.tanh %177 : vector<8x32xf32>
    %179 = arith.mulf %174, %178 : vector<8x32xf32>
    %c56 = arith.constant 56 : index
    %c0_36 = arith.constant 0 : index
    %180 = vector.load %arg9[%c56, %c0_36] : memref<88x32xf32, #tpu.memory_space<vmem>>, vector<8x32xf32>
    tpu.vector_store %arg9[%c56, %c0_36], %179 {strides = array<i32>} : memref<88x32xf32, #tpu.memory_space<vmem>>, vector<8x32xf32>,
    %181 = arith.truncf %179 : vector<8x32xf32> to vector<8x32xbf16>
    %cst_37 = arith.constant dense<0.000000e+00> : vector<8x128xf32>
    %182 = tpu.matmul %181, %1, %cst_37 {dimension_numbers = #tpu.dot_dimension_numbers<[1], [0], [0], [1], [0, 0, 1, 1], [], []>} : vector<8x32xbf16>, vector<32x128xbf16>, vector<8x128xf32> -> vector<8x128xf32>
    %183 = vector.broadcast %4 : vector<1x128xf32> to vector<8x128xf32>
    %184 = arith.addf %182, %183 : vector<8x128xf32>
    %185 = arith.negf %184 : vector<8x128xf32>
    %186 = math.exp %185 : vector<8x128xf32>
    %cst_38 = arith.constant 1.000000e+00 : f32
    %187 = vector.broadcast %cst_38 : f32 to vector<8x128xf32>
    %188 = arith.addf %187, %186 : vector<8x128xf32>
    %189 = arith.divf %187, %188 : vector<8x128xf32>
    %190 = vector.extract_strided_slice %189 {offsets = [0, 0], sizes = [8, 32], strides = [1, 1]} : vector<8x128xf32> to vector<8x32xf32>
    %191 = vector.extract_strided_slice %189 {offsets = [0, 96], sizes = [8, 32], strides = [1, 1]} : vector<8x128xf32> to vector<8x32xf32>
    %192 = vector.extract_strided_slice %184 {offsets = [0, 64], sizes = [8, 32], strides = [1, 1]} : vector<8x128xf32> to vector<8x32xf32>
    %193 = math.tanh %192 : vector<8x32xf32>
    %194 = arith.mulf %190, %193 : vector<8x32xf32>
    %195 = math.tanh %194 : vector<8x32xf32>
    %196 = arith.mulf %191, %195 : vector<8x32xf32>
    %c64 = arith.constant 64 : index
    %c0_39 = arith.constant 0 : index
    %197 = vector.load %arg9[%c64, %c0_39] : memref<88x32xf32, #tpu.memory_space<vmem>>, vector<8x32xf32>
    tpu.vector_store %arg9[%c64, %c0_39], %196 {strides = array<i32>} : memref<88x32xf32, #tpu.memory_space<vmem>>, vector<8x32xf32>,
    %198 = arith.truncf %196 : vector<8x32xf32> to vector<8x32xbf16>
    %cst_40 = arith.constant dense<0.000000e+00> : vector<8x128xf32>
    %199 = tpu.matmul %198, %1, %cst_40 {dimension_numbers = #tpu.dot_dimension_numbers<[1], [0], [0], [1], [0, 0, 1, 1], [], []>} : vector<8x32xbf16>, vector<32x128xbf16>, vector<8x128xf32> -> vector<8x128xf32>
    %200 = vector.broadcast %4 : vector<1x128xf32> to vector<8x128xf32>
    %201 = arith.addf %199, %200 : vector<8x128xf32>
    %202 = arith.negf %201 : vector<8x128xf32>
    %203 = math.exp %202 : vector<8x128xf32>
    %cst_41 = arith.constant 1.000000e+00 : f32
    %204 = vector.broadcast %cst_41 : f32 to vector<8x128xf32>
    %205 = arith.addf %204, %203 : vector<8x128xf32>
    %206 = arith.divf %204, %205 : vector<8x128xf32>
    %207 = vector.extract_strided_slice %206 {offsets = [0, 0], sizes = [8, 32], strides = [1, 1]} : vector<8x128xf32> to vector<8x32xf32>
    %208 = vector.extract_strided_slice %206 {offsets = [0, 96], sizes = [8, 32], strides = [1, 1]} : vector<8x128xf32> to vector<8x32xf32>
    %209 = vector.extract_strided_slice %201 {offsets = [0, 64], sizes = [8, 32], strides = [1, 1]} : vector<8x128xf32> to vector<8x32xf32>
    %210 = math.tanh %209 : vector<8x32xf32>
    %211 = arith.mulf %207, %210 : vector<8x32xf32>
    %212 = math.tanh %211 : vector<8x32xf32>
    %213 = arith.mulf %208, %212 : vector<8x32xf32>
    %c72 = arith.constant 72 : index
    %c0_42 = arith.constant 0 : index
    %214 = vector.load %arg9[%c72, %c0_42] : memref<88x32xf32, #tpu.memory_space<vmem>>, vector<8x32xf32>
    tpu.vector_store %arg9[%c72, %c0_42], %213 {strides = array<i32>} : memref<88x32xf32, #tpu.memory_space<vmem>>, vector<8x32xf32>,
    %215 = arith.truncf %213 : vector<8x32xf32> to vector<8x32xbf16>
    %cst_43 = arith.constant dense<0.000000e+00> : vector<8x128xf32>
    %216 = tpu.matmul %215, %1, %cst_43 {dimension_numbers = #tpu.dot_dimension_numbers<[1], [0], [0], [1], [0, 0, 1, 1], [], []>} : vector<8x32xbf16>, vector<32x128xbf16>, vector<8x128xf32> -> vector<8x128xf32>
    %217 = vector.broadcast %4 : vector<1x128xf32> to vector<8x128xf32>
    %218 = arith.addf %216, %217 : vector<8x128xf32>
    %219 = arith.negf %218 : vector<8x128xf32>
    %220 = math.exp %219 : vector<8x128xf32>
    %cst_44 = arith.constant 1.000000e+00 : f32
    %221 = vector.broadcast %cst_44 : f32 to vector<8x128xf32>
    %222 = arith.addf %221, %220 : vector<8x128xf32>
    %223 = arith.divf %221, %222 : vector<8x128xf32>
    %224 = vector.extract_strided_slice %223 {offsets = [0, 0], sizes = [8, 32], strides = [1, 1]} : vector<8x128xf32> to vector<8x32xf32>
    %225 = vector.extract_strided_slice %223 {offsets = [0, 96], sizes = [8, 32], strides = [1, 1]} : vector<8x128xf32> to vector<8x32xf32>
    %226 = vector.extract_strided_slice %218 {offsets = [0, 64], sizes = [8, 32], strides = [1, 1]} : vector<8x128xf32> to vector<8x32xf32>
    %227 = math.tanh %226 : vector<8x32xf32>
    %228 = arith.mulf %224, %227 : vector<8x32xf32>
    %229 = math.tanh %228 : vector<8x32xf32>
    %230 = arith.mulf %225, %229 : vector<8x32xf32>
    %c80 = arith.constant 80 : index
    %c0_45 = arith.constant 0 : index
    %231 = vector.load %arg9[%c80, %c0_45] : memref<88x32xf32, #tpu.memory_space<vmem>>, vector<8x32xf32>
    tpu.vector_store %arg9[%c80, %c0_45], %230 {strides = array<i32>} : memref<88x32xf32, #tpu.memory_space<vmem>>, vector<8x32xf32>,
    %c0_46 = arith.constant 0 : index
    %c0_47 = arith.constant 0 : index
    %232 = vector.load %arg9[%c0_46, %c0_47] : memref<88x32xf32, #tpu.memory_space<vmem>>, vector<88x32xf32>
    %c0_48 = arith.constant 0 : index
    %c0_49 = arith.constant 0 : index
    %233 = vector.load %arg6[%c0_48, %c0_49] : memref<32x4xf32, #tpu.memory_space<vmem>>, vector<32x4xf32>
    %cst_50 = arith.constant dense<0.000000e+00> : vector<88x4xf32>
    %234 = tpu.matmul %232, %233, %cst_50 {dimension_numbers = #tpu.dot_dimension_numbers<[1], [0], [0], [1], [0, 0, 1, 1], [], []>} : vector<88x32xf32>, vector<32x4xf32>, vector<88x4xf32> -> vector<88x4xf32>
    %c0_51 = arith.constant 0 : index
    %c0_52 = arith.constant 0 : index
    %235 = vector.load %arg7[%c0_51, %c0_52] : memref<1x4xf32, #tpu.memory_space<vmem>>, vector<1x4xf32>
    %236 = vector.broadcast %235 : vector<1x4xf32> to vector<88x4xf32>
    %237 = arith.addf %234, %236 : vector<88x4xf32>
    %c0_53 = arith.constant 0 : index
    %c0_54 = arith.constant 0 : index
    %238 = vector.load %arg8[%c0_53, %c0_54] : memref<88x4xf32, #tpu.memory_space<vmem>>, vector<88x4xf32>
    tpu.vector_store %arg8[%c0_53, %c0_54], %237 {strides = array<i32>} : memref<88x4xf32, #tpu.memory_space<vmem>>, vector<88x4xf32>,
    return
  }
}

</mosaic_0001>

<llo_original>
// kernel: model_forward.1
$region0: #{model_forward.1}
  #allocation0 [shape = 'u32[]', space=smem, size = 0x4, offset = 0x4, fixed_abs, tag = 'smem constant byte address 0x4 - core index']
  #allocation1 [shape = 'u32[72,128]{1,0:T(1,128)}', space=vmem, size = 0x9000, scoped, tag = 'internal scratch']
  #allocation2 [shape = 'f32[88,32]{1,0:T(8,128)}', space=vmem, size = 0xb000, scoped, tag = 'scratch operand']
  %s0 = inlined_call_operand.vmem [shape: f32[64,4], index: 0, kind: input, shape index: {}]
  %s1 = inlined_call_operand.vmem [shape: f32[4,128], index: 1, kind: input, shape index: {}]
  %s2 = inlined_call_operand.vmem [shape: f32[1,128], index: 2, kind: input, shape index: {}]
  %s3 = inlined_call_operand.vmem [shape: f32[32,128], index: 3, kind: input, shape index: {}]
  %s4 = inlined_call_operand.vmem [shape: f32[32,128], index: 4, kind: input, shape index: {}]
  %s5 = inlined_call_operand.vmem [shape: f32[1,128], index: 5, kind: input, shape index: {}]
  %s6 = inlined_call_operand.vmem [shape: f32[32,4], index: 6, kind: input, shape index: {}]
  %s7 = inlined_call_operand.vmem [shape: f32[1,4], index: 7, kind: input, shape index: {}]
  %s8 = inlined_call_operand.vmem [shape: f32[88,4], index: 8, kind: output, shape index: {}]
  %s9 = sld [smem:[#allocation0]]
  $region42: #{model_forward.1} parent=0
    _
  %s11 = ssub.s32 1, %s9
  %s12 = scalar_select 0, %s11, %s9
  // Predicated region
  $region2: #{model_forward.1} parent=0 // pred_check
    _
  $region3: #{model_forward.1} parent=0 // pred_check_branch
    %14 = sbr.rel (0) target = $region5
  $region4: #{model_forward.1} parent=0 // pred_region
    _
  $region5: #{model_forward.1} parent=0 // pred_fallthru
    _
  // Predicated region
  $region6: #{model_forward.1} parent=0 // pred_check
    _
  $region7: #{model_forward.1} parent=0 // pred_check_branch
    %16 = sbr.rel (0) target = $region9
  $region8: #{model_forward.1} parent=0 // pred_region
    _
  $region9: #{model_forward.1} parent=0 // pred_fallthru
    _
  // Predicated region
  $region10: #{model_forward.1} parent=0 // pred_check
    _
  $region11: #{model_forward.1} parent=0 // pred_check_branch
    %18 = sbr.rel (0) target = $region13
  $region12: #{model_forward.1} parent=0 // pred_region
    _
  $region13: #{model_forward.1} parent=0 // pred_fallthru
    _
  // Predicated region
  $region14: #{model_forward.1} parent=0 // pred_check
    _
  $region15: #{model_forward.1} parent=0 // pred_check_branch
    %20 = sbr.rel (0) target = $region17
  $region16: #{model_forward.1} parent=0 // pred_region
    _
  $region17: #{model_forward.1} parent=0 // pred_fallthru
    _
  // Predicated region
  $region18: #{model_forward.1} parent=0 // pred_check
    _
  $region19: #{model_forward.1} parent=0 // pred_check_branch
    %22 = sbr.rel (0) target = $region21
  $region20: #{model_forward.1} parent=0 // pred_region
    _
  $region21: #{model_forward.1} parent=0 // pred_fallthru
    _
  // Predicated region
  $region22: #{model_forward.1} parent=0 // pred_check
    _
  $region23: #{model_forward.1} parent=0 // pred_check_branch
    %24 = sbr.rel (0) target = $region25
  $region24: #{model_forward.1} parent=0 // pred_region
    _
  $region25: #{model_forward.1} parent=0 // pred_fallthru
    _
  // Predicated region
  $region26: #{model_forward.1} parent=0 // pred_check
    _
  $region27: #{model_forward.1} parent=0 // pred_check_branch
    %26 = sbr.rel (0) target = $region29
  $region28: #{model_forward.1} parent=0 // pred_region
    _
  $region29: #{model_forward.1} parent=0 // pred_fallthru
    _
  // Predicated region
  $region30: #{model_forward.1} parent=0 // pred_check
    _
  $region31: #{model_forward.1} parent=0 // pred_check_branch
    %28 = sbr.rel (0) target = $region33
  $region32: #{model_forward.1} parent=0 // pred_region
    _
  $region33: #{model_forward.1} parent=0 // pred_fallthru
    _
  %v30 = vld [vmem:[%s3] sm:$0xff]
  %v31 = vld [vmem:[%s3 + $0x8] sm:$0xff]
  %v32 = vld [vmem:[%s3 + $0x10] sm:$0xff]
  %v33 = vld [vmem:[%s3 + $0x18] sm:$0xff]
  %v34 = vpack.c.bf16 %v31, %v30
  %v35 = vpack.c.bf16 %v33, %v32
  %v36 = vld [vmem:[%s4] sm:$0xff]
  %v37 = vld [vmem:[%s4 + $0x8] sm:$0xff]
  %v38 = vld [vmem:[%s4 + $0x10] sm:$0xff]
  %v39 = vld [vmem:[%s4 + $0x18] sm:$0xff]
  %v40 = vpack.c.bf16 %v37, %v36
  %v41 = vpack.c.bf16 %v39, %v38
  %v42 = vld [vmem:[%s5] sm:$0x1]
  %v43 = vld [vmem:[%s0] sm:$0xff]
  %v44 = vld [vmem:[%s0 + $0x8] sm:$0xff]
  %v45 = vld [vmem:[%s0 + $0x10] sm:$0xff]
  %v46 = vld [vmem:[%s0 + $0x18] sm:$0xff]
  %v47 = vld [vmem:[%s0 + $0x20] sm:$0xff]
  %v48 = vld [vmem:[%s0 + $0x28] sm:$0xff]
  %v49 = vld [vmem:[%s0 + $0x30] sm:$0xff]
  %v50 = vld [vmem:[%s0 + $0x38] sm:$0xff]
  %v51 = vld [vmem:[%s1] sm:$0xf]
  %v52 = vld [vmem:[%s2] sm:$0x1]
  %v54 = vperm.slane %v52, 0
  %vm56 = vcmask 31744
  %v58 = vsel %vm56, %v43, 0
  %v61 = vsel %vm56, %v44, 0
  %v64 = vsel %vm56, %v45, 0
  %v67 = vsel %vm56, %v46, 0
  %v70 = vsel %vm56, %v47, 0
  %v73 = vsel %vm56, %v48, 0
  %v76 = vsel %vm56, %v49, 0
  %v79 = vsel %vm56, %v50, 0
  %vm81 = vcmask 1043456
  %v83 = vsel %vm81, %v51, 0
  %85 = vmatpush.msra.mxu0 0.0
  %86 = vmatpush.msra.mxu0 0.0
  %87 = vmatpush.msra.mxu0 0.0
  %88 = vmatpush.msra.mxu0 0.0
  %89 = vmatpush.msra.mxu0 0.0
  %90 = vmatpush.msra.mxu0 0.0
  %91 = vmatpush.msra.mxu0 0.0
  %92 = vmatpush.msra.mxu0 0.0
  %93 = vmatpush.msra.mxu0 0.0
  %94 = vmatpush.msra.mxu0 0.0
  %95 = vmatpush.msra.mxu0 0.0
  %96 = vmatpush.msra.mxu0 0.0
  %97 = vmatpush.msra.mxu0 0.0
  %98 = vmatpush.msra.mxu0 0.0
  %99 = vmatpush.msra.mxu0 0.0
  %100 = vmatpush.msra.mxu0 %v83
  %101 = vmatmul.f32.gmra.mxu0 %v58
  %v102 = vpop.f32.mrf.mxu0
  %v103 = vadd.f32 %v54, %v102
  %104 = vmatmul.f32.gmra.mxu0 %v61
  %v105 = vpop.f32.mrf.mxu0
  %v106 = vadd.f32 %v54, %v105
  %107 = vmatmul.f32.gmra.mxu0 %v64
  %v108 = vpop.f32.mrf.mxu0
  %v109 = vadd.f32 %v54, %v108
  %110 = vmatmul.f32.gmra.mxu0 %v67
  %v111 = vpop.f32.mrf.mxu0
  %v112 = vadd.f32 %v54, %v111
  %113 = vmatmul.f32.gmra.mxu0 %v70
  %v114 = vpop.f32.mrf.mxu0
  %v115 = vadd.f32 %v54, %v114
  %116 = vmatmul.f32.gmra.mxu0 %v73
  %v117 = vpop.f32.mrf.mxu0
  %v118 = vadd.f32 %v54, %v117
  %119 = vmatmul.f32.gmra.mxu0 %v76
  %v120 = vpop.f32.mrf.mxu0
  %v121 = vadd.f32 %v54, %v120
  %122 = vmatmul.f32.gmra.mxu0 %v79
  %v123 = vpop.f32.mrf.mxu0
  %v124 = vadd.f32 %v54, %v123
  %125 = vdwg.mxu0
  %v126 = vxor.u32 %v103, 2147483648
  %v127 = vmul.f32 %v126, 1.442695
  %v128 = vpow.pop %v127
  %v129 = vadd.f32 %v128, 1.0
  %v130 = vrcp.pop %v129
  %v131 = vmul.f32 %v129, %v130
  %v132 = vsub.f32 1.0, %v131
  %v133 = vmul.f32 %v130, %v132
  %v134 = vadd.f32 %v130, %v133
  %vm135 = vweird.f32 %v129
  %vm136 = vweird.f32 %v130
  %vm137 = vmor %vm135, %vm136
  %v138 = vsel %vm137, %v130, %v134
  %v139 = vand.u32 2147483647, %v129
  %vm140 = vcmp.eq.f32.partialorder %v139, 8.507059e+37
  %v141 = vand.u32 %v129, 2147483648
  %v142 = vor.u32 1.1754944e-38, %v141
  %v143 = vsel %vm140, %v142, %v138
  %v144 = vmul.f32 1.0, %v143
  %v145 = vtanh.pop %v103
  %147 = vrot.lane.b32.xlu0 %v145, 64
  %v148 = vpop.permute.xlu0 %147
  %v150 = vmul.f32 %v144, %v148
  %v151 = vtanh.pop %v150
  %153 = vrot.lane.b32.xlu0 %v151, 96
  %v154 = vpop.permute.xlu0 %153
  %v156 = vmul.f32 %v144, %v154
  %v157 = vpack.c.bf16 %v156, %v156
  %159 = vrot.lane.b32.xlu0 %v157, 32
  %v160 = vpop.permute.xlu0 %159
  %vm161 = vcmask 261120
  %v163 = vsel %vm161, %v160, 0
  %165 = vmatpush.bf16.msra.mxu0 0
  %166 = vmatpush.bf16.msra.mxu0 0
  %167 = vmatpush.bf16.msra.mxu0 0
  %168 = vmatpush.bf16.msra.mxu0 0
  %169 = vmatpush.bf16.msra.mxu0 0
  %170 = vmatpush.bf16.msra.mxu0 0
  %171 = vmatpush.bf16.msra.mxu0 %v41
  %172 = vmatpush.bf16.msra.mxu0 %v40
  %173 = vmatmul.bf16.gmra.mxu0 %v163
  %v174 = vpop.f32.mrf.mxu0
  %v175 = vadd.f32 0.0, %v174
  %v176 = vpop.f32.mrf.mxu0
  %177 = vdwg.mxu0
  %v178 = vadd.f32 %v106, %v175
  %v179 = vxor.u32 %v178, 2147483648
  %v180 = vmul.f32 %v179, 1.442695
  %v181 = vpow.pop %v180
  %v182 = vadd.f32 %v181, 1.0
  %v183 = vrcp.pop %v182
  %v184 = vmul.f32 %v182, %v183
  %v185 = vsub.f32 1.0, %v184
  %v186 = vmul.f32 %v183, %v185
  %v187 = vadd.f32 %v183, %v186
  %vm188 = vweird.f32 %v182
  %vm189 = vweird.f32 %v183
  %vm190 = vmor %vm188, %vm189
  %v191 = vsel %vm190, %v183, %v187
  %v192 = vand.u32 2147483647, %v182
  %vm193 = vcmp.eq.f32.partialorder %v192, 8.507059e+37
  %v194 = vand.u32 %v182, 2147483648
  %v195 = vor.u32 1.1754944e-38, %v194
  %v196 = vsel %vm193, %v195, %v191
  %v197 = vmul.f32 1.0, %v196
  %v198 = vtanh.pop %v178
  %200 = vrot.lane.b32.xlu0 %v150, 32
  %v201 = vpop.permute.xlu0 %200
  %v203 = vmul.f32 %v197, %v201
  %205 = vrot.lane.b32.xlu0 %v198, 64
  %v206 = vpop.permute.xlu0 %205
  %v208 = vmul.f32 %v197, %v206
  %210 = vrot.lane.b32.xlu0 %v208, 32
  %v211 = vpop.permute.xlu0 %210
  %v213 = vadd.f32 %v203, %v211
  %v214 = vtanh.pop %v213
  %216 = vrot.lane.b32.xlu0 %v214, 64
  %v217 = vpop.permute.xlu0 %216
  %v219 = vmul.f32 %v197, %v217
  %221 = vrot.lane.b32.xlu0 %v219, 32
  %v222 = vpop.permute.xlu0 %221
  %224 = vst.msk [vmem:[#allocation2] sm:$0xff] %vm161, %v222
  %v225 = vpack.c.bf16 %v219, %v219
  %227 = vrot.lane.b32.xlu0 %v225, 32
  %v228 = vpop.permute.xlu0 %227
  %v230 = vsel %vm161, %v228, 0
  %232 = vmatpush.bf16.msra.mxu0 0
  %233 = vmatpush.bf16.msra.mxu0 0
  %234 = vmatpush.bf16.msra.mxu0 0
  %235 = vmatpush.bf16.msra.mxu0 0
  %236 = vmatpush.bf16.msra.mxu0 0
  %237 = vmatpush.bf16.msra.mxu0 0
  %238 = vmatpush.bf16.msra.mxu0 %v41
  %239 = vmatpush.bf16.msra.mxu0 %v40
  %240 = vmatmul.bf16.gmra.mxu0 %v230
  %v241 = vpop.f32.mrf.mxu0
  %v242 = vadd.f32 0.0, %v241
  %v243 = vpop.f32.mrf.mxu0
  %244 = vdwg.mxu0
  %v245 = vadd.f32 %v109, %v242
  %v246 = vxor.u32 %v245, 2147483648
  %v247 = vmul.f32 %v246, 1.442695
  %v248 = vpow.pop %v247
  %v249 = vadd.f32 %v248, 1.0
  %v250 = vrcp.pop %v249
  %v251 = vmul.f32 %v249, %v250
  %v252 = vsub.f32 1.0, %v251
  %v253 = vmul.f32 %v250, %v252
  %v254 = vadd.f32 %v250, %v253
  %vm255 = vweird.f32 %v249
  %vm256 = vweird.f32 %v250
  %vm257 = vmor %vm255, %vm256
  %v258 = vsel %vm257, %v250, %v254
  %v259 = vand.u32 2147483647, %v249
  %vm260 = vcmp.eq.f32.partialorder %v259, 8.507059e+37
  %v261 = vand.u32 %v249, 2147483648
  %v262 = vor.u32 1.1754944e-38, %v261
  %v263 = vsel %vm260, %v262, %v258
  %v264 = vmul.f32 1.0, %v263
  %v265 = vtanh.pop %v245
  %v266 = vmul.f32 %v264, %v213
  %268 = vrot.lane.b32.xlu0 %v265, 64
  %v269 = vpop.permute.xlu0 %268
  %v271 = vmul.f32 %v264, %v269
  %273 = vrot.lane.b32.xlu0 %v271, 32
  %v274 = vpop.permute.xlu0 %273
  %v276 = vadd.f32 %v266, %v274
  %v277 = vtanh.pop %v276
  %279 = vrot.lane.b32.xlu0 %v277, 64
  %v280 = vpop.permute.xlu0 %279
  %v282 = vmul.f32 %v264, %v280
  %284 = vrot.lane.b32.xlu0 %v282, 32
  %v285 = vpop.permute.xlu0 %284
  %287 = vst.msk [vmem:[#allocation2 + $0x8] sm:$0xff] %vm161, %v285
  %v288 = vpack.c.bf16 %v282, %v282
  %290 = vrot.lane.b32.xlu0 %v288, 32
  %v291 = vpop.permute.xlu0 %290
  %v293 = vsel %vm161, %v291, 0
  %295 = vmatpush.bf16.msra.mxu0 0
  %296 = vmatpush.bf16.msra.mxu0 0
  %297 = vmatpush.bf16.msra.mxu0 0
  %298 = vmatpush.bf16.msra.mxu0 0
  %299 = vmatpush.bf16.msra.mxu0 0
  %300 = vmatpush.bf16.msra.mxu0 0
  %301 = vmatpush.bf16.msra.mxu0 %v41
  %302 = vmatpush.bf16.msra.mxu0 %v40
  %303 = vmatmul.bf16.gmra.mxu0 %v293
  %v304 = vpop.f32.mrf.mxu0
  %v305 = vadd.f32 0.0, %v304
  %v306 = vpop.f32.mrf.mxu0
  %307 = vdwg.mxu0
  %v308 = vadd.f32 %v112, %v305
  %v309 = vxor.u32 %v308, 2147483648
  %v310 = vmul.f32 %v309, 1.442695
  %v311 = vpow.pop %v310
  %v312 = vadd.f32 %v311, 1.0
  %v313 = vrcp.pop %v312
  %v314 = vmul.f32 %v312, %v313
  %v315 = vsub.f32 1.0, %v314
  %v316 = vmul.f32 %v313, %v315
  %v317 = vadd.f32 %v313, %v316
  %vm318 = vweird.f32 %v312
  %vm319 = vweird.f32 %v313
  %vm320 = vmor %vm318, %vm319
  %v321 = vsel %vm320, %v313, %v317
  %v322 = vand.u32 2147483647, %v312
  %vm323 = vcmp.eq.f32.partialorder %v322, 8.507059e+37
  %v324 = vand.u32 %v312, 2147483648
  %v325 = vor.u32 1.1754944e-38, %v324
  %v326 = vsel %vm323, %v325, %v321
  %v327 = vmul.f32 1.0, %v326
  %v328 = vtanh.pop %v308
  %v329 = vmul.f32 %v327, %v276
  %331 = vrot.lane.b32.xlu0 %v328, 64
  %v332 = vpop.permute.xlu0 %331
  %v334 = vmul.f32 %v327, %v332
  %336 = vrot.lane.b32.xlu0 %v334, 32
  %v337 = vpop.permute.xlu0 %336
  %v339 = vadd.f32 %v329, %v337
  %v340 = vtanh.pop %v339
  %342 = vrot.lane.b32.xlu0 %v340, 64
  %v343 = vpop.permute.xlu0 %342
  %v345 = vmul.f32 %v327, %v343
  %347 = vrot.lane.b32.xlu0 %v345, 32
  %v348 = vpop.permute.xlu0 %347
  %350 = vst.msk [vmem:[#allocation2 + $0x10] sm:$0xff] %vm161, %v348
  %v351 = vpack.c.bf16 %v345, %v345
  %353 = vrot.lane.b32.xlu0 %v351, 32
  %v354 = vpop.permute.xlu0 %353
  %v356 = vsel %vm161, %v354, 0
  %358 = vmatpush.bf16.msra.mxu0 0
  %359 = vmatpush.bf16.msra.mxu0 0
  %360 = vmatpush.bf16.msra.mxu0 0
  %361 = vmatpush.bf16.msra.mxu0 0
  %362 = vmatpush.bf16.msra.mxu0 0
  %363 = vmatpush.bf16.msra.mxu0 0
  %364 = vmatpush.bf16.msra.mxu0 %v41
  %365 = vmatpush.bf16.msra.mxu0 %v40
  %366 = vmatmul.bf16.gmra.mxu0 %v356
  %v367 = vpop.f32.mrf.mxu0
  %v368 = vadd.f32 0.0, %v367
  %v369 = vpop.f32.mrf.mxu0
  %370 = vdwg.mxu0
  %v371 = vadd.f32 %v115, %v368
  %v372 = vxor.u32 %v371, 2147483648
  %v373 = vmul.f32 %v372, 1.442695
  %v374 = vpow.pop %v373
  %v375 = vadd.f32 %v374, 1.0
  %v376 = vrcp.pop %v375
  %v377 = vmul.f32 %v375, %v376
  %v378 = vsub.f32 1.0, %v377
  %v379 = vmul.f32 %v376, %v378
  %v380 = vadd.f32 %v376, %v379
  %vm381 = vweird.f32 %v375
  %vm382 = vweird.f32 %v376
  %vm383 = vmor %vm381, %vm382
  %v384 = vsel %vm383, %v376, %v380
  %v385 = vand.u32 2147483647, %v375
  %vm386 = vcmp.eq.f32.partialorder %v385, 8.507059e+37
  %v387 = vand.u32 %v375, 2147483648
  %v388 = vor.u32 1.1754944e-38, %v387
  %v389 = vsel %vm386, %v388, %v384
  %v390 = vmul.f32 1.0, %v389
  %v391 = vtanh.pop %v371
  %v392 = vmul.f32 %v390, %v339
  %394 = vrot.lane.b32.xlu0 %v391, 64
  %v395 = vpop.permute.xlu0 %394
  %v397 = vmul.f32 %v390, %v395
  %399 = vrot.lane.b32.xlu0 %v397, 32
  %v400 = vpop.permute.xlu0 %399
  %v402 = vadd.f32 %v392, %v400
  %v403 = vtanh.pop %v402
  %405 = vrot.lane.b32.xlu0 %v403, 64
  %v406 = vpop.permute.xlu0 %405
  %v408 = vmul.f32 %v390, %v406
  %410 = vrot.lane.b32.xlu0 %v408, 32
  %v411 = vpop.permute.xlu0 %410
  %413 = vst.msk [vmem:[#allocation2 + $0x18] sm:$0xff] %vm161, %v411
  %v414 = vpack.c.bf16 %v408, %v408
  %416 = vrot.lane.b32.xlu0 %v414, 32
  %v417 = vpop.permute.xlu0 %416
  %v419 = vsel %vm161, %v417, 0
  %421 = vmatpush.bf16.msra.mxu0 0
  %422 = vmatpush.bf16.msra.mxu0 0
  %423 = vmatpush.bf16.msra.mxu0 0
  %424 = vmatpush.bf16.msra.mxu0 0
  %425 = vmatpush.bf16.msra.mxu0 0
  %426 = vmatpush.bf16.msra.mxu0 0
  %427 = vmatpush.bf16.msra.mxu0 %v41
  %428 = vmatpush.bf16.msra.mxu0 %v40
  %429 = vmatmul.bf16.gmra.mxu0 %v419
  %v430 = vpop.f32.mrf.mxu0
  %v431 = vadd.f32 0.0, %v430
  %v432 = vpop.f32.mrf.mxu0
  %433 = vdwg.mxu0
  %v434 = vadd.f32 %v118, %v431
  %v435 = vxor.u32 %v434, 2147483648
  %v436 = vmul.f32 %v435, 1.442695
  %v437 = vpow.pop %v436
  %v438 = vadd.f32 %v437, 1.0
  %v439 = vrcp.pop %v438
  %v440 = vmul.f32 %v438, %v439
  %v441 = vsub.f32 1.0, %v440
  %v442 = vmul.f32 %v439, %v441
  %v443 = vadd.f32 %v439, %v442
  %vm444 = vweird.f32 %v438
  %vm445 = vweird.f32 %v439
  %vm446 = vmor %vm444, %vm445
  %v447 = vsel %vm446, %v439, %v443
  %v448 = vand.u32 2147483647, %v438
  %vm449 = vcmp.eq.f32.partialorder %v448, 8.507059e+37
  %v450 = vand.u32 %v438, 2147483648
  %v451 = vor.u32 1.1754944e-38, %v450
  %v452 = vsel %vm449, %v451, %v447
  %v453 = vmul.f32 1.0, %v452
  %v454 = vtanh.pop %v434
  %v455 = vmul.f32 %v453, %v402
  %457 = vrot.lane.b32.xlu0 %v454, 64
  %v458 = vpop.permute.xlu0 %457
  %v460 = vmul.f32 %v453, %v458
  %462 = vrot.lane.b32.xlu0 %v460, 32
  %v463 = vpop.permute.xlu0 %462
  %v465 = vadd.f32 %v455, %v463
  %v466 = vtanh.pop %v465
  %468 = vrot.lane.b32.xlu0 %v466, 64
  %v469 = vpop.permute.xlu0 %468
  %v471 = vmul.f32 %v453, %v469
  %473 = vrot.lane.b32.xlu0 %v471, 32
  %v474 = vpop.permute.xlu0 %473
  %476 = vst.msk [vmem:[#allocation2 + $0x20] sm:$0xff] %vm161, %v474
  %v477 = vpack.c.bf16 %v471, %v471
  %479 = vrot.lane.b32.xlu0 %v477, 32
  %v480 = vpop.permute.xlu0 %479
  %v482 = vsel %vm161, %v480, 0
  %484 = vmatpush.bf16.msra.mxu0 0
  %485 = vmatpush.bf16.msra.mxu0 0
  %486 = vmatpush.bf16.msra.mxu0 0
  %487 = vmatpush.bf16.msra.mxu0 0
  %488 = vmatpush.bf16.msra.mxu0 0
  %489 = vmatpush.bf16.msra.mxu0 0
  %490 = vmatpush.bf16.msra.mxu0 %v41
  %491 = vmatpush.bf16.msra.mxu0 %v40
  %492 = vmatmul.bf16.gmra.mxu0 %v482
  %v493 = vpop.f32.mrf.mxu0
  %v494 = vadd.f32 0.0, %v493
  %v495 = vpop.f32.mrf.mxu0
  %496 = vdwg.mxu0
  %v497 = vadd.f32 %v121, %v494
  %v498 = vxor.u32 %v497, 2147483648
  %v499 = vmul.f32 %v498, 1.442695
  %v500 = vpow.pop %v499
  %v501 = vadd.f32 %v500, 1.0
  %v502 = vrcp.pop %v501
  %v503 = vmul.f32 %v501, %v502
  %v504 = vsub.f32 1.0, %v503
  %v505 = vmul.f32 %v502, %v504
  %v506 = vadd.f32 %v502, %v505
  %vm507 = vweird.f32 %v501
  %vm508 = vweird.f32 %v502
  %vm509 = vmor %vm507, %vm508
  %v510 = vsel %vm509, %v502, %v506
  %v511 = vand.u32 2147483647, %v501
  %vm512 = vcmp.eq.f32.partialorder %v511, 8.507059e+37
  %v513 = vand.u32 %v501, 2147483648
  %v514 = vor.u32 1.1754944e-38, %v513
  %v515 = vsel %vm512, %v514, %v510
  %v516 = vmul.f32 1.0, %v515
  %v517 = vtanh.pop %v497
  %v518 = vmul.f32 %v516, %v465
  %520 = vrot.lane.b32.xlu0 %v517, 64
  %v521 = vpop.permute.xlu0 %520
  %v523 = vmul.f32 %v516, %v521
  %525 = vrot.lane.b32.xlu0 %v523, 32
  %v526 = vpop.permute.xlu0 %525
  %v528 = vadd.f32 %v518, %v526
  %v529 = vtanh.pop %v528
  %531 = vrot.lane.b32.xlu0 %v529, 64
  %v532 = vpop.permute.xlu0 %531
  %v534 = vmul.f32 %v516, %v532
  %536 = vrot.lane.b32.xlu0 %v534, 32
  %v537 = vpop.permute.xlu0 %536
  %539 = vst.msk [vmem:[#allocation2 + $0x28] sm:$0xff] %vm161, %v537
  %v540 = vpack.c.bf16 %v534, %v534
  %542 = vrot.lane.b32.xlu0 %v540, 32
  %v543 = vpop.permute.xlu0 %542
  %v545 = vsel %vm161, %v543, 0
  %547 = vmatpush.bf16.msra.mxu0 0
  %548 = vmatpush.bf16.msra.mxu0 0
  %549 = vmatpush.bf16.msra.mxu0 0
  %550 = vmatpush.bf16.msra.mxu0 0
  %551 = vmatpush.bf16.msra.mxu0 0
  %552 = vmatpush.bf16.msra.mxu0 0
  %553 = vmatpush.bf16.msra.mxu0 %v41
  %554 = vmatpush.bf16.msra.mxu0 %v40
  %555 = vmatmul.bf16.gmra.mxu0 %v545
  %v556 = vpop.f32.mrf.mxu0
  %v557 = vadd.f32 0.0, %v556
  %v558 = vpop.f32.mrf.mxu0
  %559 = vdwg.mxu0
  %v560 = vadd.f32 %v124, %v557
  %v561 = vxor.u32 %v560, 2147483648
  %v562 = vmul.f32 %v561, 1.442695
  %v563 = vpow.pop %v562
  %v564 = vadd.f32 %v563, 1.0
  %v565 = vrcp.pop %v564
  %v566 = vmul.f32 %v564, %v565
  %v567 = vsub.f32 1.0, %v566
  %v568 = vmul.f32 %v565, %v567
  %v569 = vadd.f32 %v565, %v568
  %vm570 = vweird.f32 %v564
  %vm571 = vweird.f32 %v565
  %vm572 = vmor %vm570, %vm571
  %v573 = vsel %vm572, %v565, %v569
  %v574 = vand.u32 2147483647, %v564
  %vm575 = vcmp.eq.f32.partialorder %v574, 8.507059e+37
  %v576 = vand.u32 %v564, 2147483648
  %v577 = vor.u32 1.1754944e-38, %v576
  %v578 = vsel %vm575, %v577, %v573
  %v579 = vmul.f32 1.0, %v578
  %v580 = vtanh.pop %v560
  %v581 = vmul.f32 %v579, %v528
  %583 = vrot.lane.b32.xlu0 %v580, 64
  %v584 = vpop.permute.xlu0 %583
  %v586 = vmul.f32 %v579, %v584
  %588 = vrot.lane.b32.xlu0 %v586, 32
  %v589 = vpop.permute.xlu0 %588
  %v591 = vadd.f32 %v581, %v589
  %v592 = vtanh.pop %v591
  %594 = vrot.lane.b32.xlu0 %v592, 64
  %v595 = vpop.permute.xlu0 %594
  %v597 = vmul.f32 %v579, %v595
  %599 = vrot.lane.b32.xlu0 %v597, 32
  %v600 = vpop.permute.xlu0 %599
  %602 = vst.msk [vmem:[#allocation2 + $0x30] sm:$0xff] %vm161, %v600
  %v603 = vpack.c.bf16 %v597, %v597
  %v605 = vperm.slane %v42, 0
  %608 = vrot.lane.b32.xlu0 %v603, 32
  %v609 = vpop.permute.xlu0 %608
  %v611 = vsel %vm161, %v609, 0
  %613 = vmatpush.bf16.msra.mxu0 0
  %614 = vmatpush.bf16.msra.mxu0 0
  %615 = vmatpush.bf16.msra.mxu0 0
  %616 = vmatpush.bf16.msra.mxu0 0
  %617 = vmatpush.bf16.msra.mxu0 0
  %618 = vmatpush.bf16.msra.mxu0 0
  %619 = vmatpush.bf16.msra.mxu0 %v35
  %620 = vmatpush.bf16.msra.mxu0 %v34
  %621 = vmatmul.bf16.gmra.mxu0 %v611
  %v622 = vpop.f32.mrf.mxu0
  %v623 = vadd.f32 %v605, %v622
  %v624 = vpop.f32.mrf.mxu0
  %625 = vdwg.mxu0
  %v626 = vxor.u32 %v623, 2147483648
  %v627 = vmul.f32 %v626, 1.442695
  %v628 = vpow.pop %v627
  %v629 = vadd.f32 %v628, 1.0
  %v630 = vrcp.pop %v629
  %v631 = vmul.f32 %v629, %v630
  %v632 = vsub.f32 1.0, %v631
  %v633 = vmul.f32 %v630, %v632
  %v634 = vadd.f32 %v630, %v633
  %vm635 = vweird.f32 %v629
  %vm636 = vweird.f32 %v630
  %vm637 = vmor %vm635, %vm636
  %v638 = vsel %vm637, %v630, %v634
  %v639 = vand.u32 2147483647, %v629
  %vm640 = vcmp.eq.f32.partialorder %v639, 8.507059e+37
  %v641 = vand.u32 %v629, 2147483648
  %v642 = vor.u32 1.1754944e-38, %v641
  %v643 = vsel %vm640, %v642, %v638
  %v644 = vmul.f32 1.0, %v643
  %v645 = vtanh.pop %v623
  %647 = vrot.lane.b32.xlu0 %v645, 64
  %v648 = vpop.permute.xlu0 %647
  %v650 = vmul.f32 %v644, %v648
  %v651 = vtanh.pop %v650
  %653 = vrot.lane.b32.xlu0 %v651, 96
  %v654 = vpop.permute.xlu0 %653
  %v656 = vmul.f32 %v644, %v654
  %658 = vrot.lane.b32.xlu0 %v656, 32
  %v659 = vpop.permute.xlu0 %658
  %661 = vst.msk [vmem:[#allocation2 + $0x38] sm:$0xff] %vm161, %v659
  %v662 = vpack.c.bf16 %v656, %v656
  %664 = vrot.lane.b32.xlu0 %v662, 32
  %v665 = vpop.permute.xlu0 %664
  %v667 = vsel %vm161, %v665, 0
  %669 = vmatpush.bf16.msra.mxu0 0
  %670 = vmatpush.bf16.msra.mxu0 0
  %671 = vmatpush.bf16.msra.mxu0 0
  %672 = vmatpush.bf16.msra.mxu0 0
  %673 = vmatpush.bf16.msra.mxu0 0
  %674 = vmatpush.bf16.msra.mxu0 0
  %675 = vmatpush.bf16.msra.mxu0 %v35
  %676 = vmatpush.bf16.msra.mxu0 %v34
  %677 = vmatmul.bf16.gmra.mxu0 %v667
  %v678 = vpop.f32.mrf.mxu0
  %v679 = vadd.f32 %v605, %v678
  %v680 = vpop.f32.mrf.mxu0
  %681 = vdwg.mxu0
  %v682 = vxor.u32 %v679, 2147483648
  %v683 = vmul.f32 %v682, 1.442695
  %v684 = vpow.pop %v683
  %v685 = vadd.f32 %v684, 1.0
  %v686 = vrcp.pop %v685
  %v687 = vmul.f32 %v685, %v686
  %v688 = vsub.f32 1.0, %v687
  %v689 = vmul.f32 %v686, %v688
  %v690 = vadd.f32 %v686, %v689
  %vm691 = vweird.f32 %v685
  %vm692 = vweird.f32 %v686
  %vm693 = vmor %vm691, %vm692
  %v694 = vsel %vm693, %v686, %v690
  %v695 = vand.u32 2147483647, %v685
  %vm696 = vcmp.eq.f32.partialorder %v695, 8.507059e+37
  %v697 = vand.u32 %v685, 2147483648
  %v698 = vor.u32 1.1754944e-38, %v697
  %v699 = vsel %vm696, %v698, %v694
  %v700 = vmul.f32 1.0, %v699
  %v701 = vtanh.pop %v679
  %703 = vrot.lane.b32.xlu0 %v701, 64
  %v704 = vpop.permute.xlu0 %703
  %v706 = vmul.f32 %v700, %v704
  %v707 = vtanh.pop %v706
  %709 = vrot.lane.b32.xlu0 %v707, 96
  %v710 = vpop.permute.xlu0 %709
  %v712 = vmul.f32 %v700, %v710
  %714 = vrot.lane.b32.xlu0 %v712, 32
  %v715 = vpop.permute.xlu0 %714
  %717 = vst.msk [vmem:[#allocation2 + $0x40] sm:$0xff] %vm161, %v715
  %v718 = vpack.c.bf16 %v712, %v712
  %720 = vrot.lane.b32.xlu0 %v718, 32
  %v721 = vpop.permute.xlu0 %720
  %v723 = vsel %vm161, %v721, 0
  %725 = vmatpush.bf16.msra.mxu0 0
  %726 = vmatpush.bf16.msra.mxu0 0
  %727 = vmatpush.bf16.msra.mxu0 0
  %728 = vmatpush.bf16.msra.mxu0 0
  %729 = vmatpush.bf16.msra.mxu0 0
  %730 = vmatpush.bf16.msra.mxu0 0
  %731 = vmatpush.bf16.msra.mxu0 %v35
  %732 = vmatpush.bf16.msra.mxu0 %v34
  %733 = vmatmul.bf16.gmra.mxu0 %v723
  %v734 = vpop.f32.mrf.mxu0
  %v735 = vadd.f32 %v605, %v734
  %v736 = vpop.f32.mrf.mxu0
  %737 = vdwg.mxu0
  %v738 = vxor.u32 %v735, 2147483648
  %v739 = vmul.f32 %v738, 1.442695
  %v740 = vpow.pop %v739
  %v741 = vadd.f32 %v740, 1.0
  %v742 = vrcp.pop %v741
  %v743 = vmul.f32 %v741, %v742
  %v744 = vsub.f32 1.0, %v743
  %v745 = vmul.f32 %v742, %v744
  %v746 = vadd.f32 %v742, %v745
  %vm747 = vweird.f32 %v741
  %vm748 = vweird.f32 %v742
  %vm749 = vmor %vm747, %vm748
  %v750 = vsel %vm749, %v742, %v746
  %v751 = vand.u32 2147483647, %v741
  %vm752 = vcmp.eq.f32.partialorder %v751, 8.507059e+37
  %v753 = vand.u32 %v741, 2147483648
  %v754 = vor.u32 1.1754944e-38, %v753
  %v755 = vsel %vm752, %v754, %v750
  %v756 = vmul.f32 1.0, %v755
  %v757 = vtanh.pop %v735
  %759 = vrot.lane.b32.xlu0 %v757, 64
  %v760 = vpop.permute.xlu0 %759
  %v762 = vmul.f32 %v756, %v760
  %v763 = vtanh.pop %v762
  %765 = vrot.lane.b32.xlu0 %v763, 96
  %v766 = vpop.permute.xlu0 %765
  %v768 = vmul.f32 %v756, %v766
  %770 = vrot.lane.b32.xlu0 %v768, 32
  %v771 = vpop.permute.xlu0 %770
  %773 = vst.msk [vmem:[#allocation2 + $0x48] sm:$0xff] %vm161, %v771
  %v774 = vpack.c.bf16 %v768, %v768
  %776 = vrot.lane.b32.xlu0 %v774, 32
  %v777 = vpop.permute.xlu0 %776
  %v779 = vsel %vm161, %v777, 0
  %781 = vmatpush.bf16.msra.mxu0 0
  %782 = vmatpush.bf16.msra.mxu0 0
  %783 = vmatpush.bf16.msra.mxu0 0
  %784 = vmatpush.bf16.msra.mxu0 0
  %785 = vmatpush.bf16.msra.mxu0 0
  %786 = vmatpush.bf16.msra.mxu0 0
  %787 = vmatpush.bf16.msra.mxu0 %v35
  %788 = vmatpush.bf16.msra.mxu0 %v34
  %789 = vmatmul.bf16.gmra.mxu0 %v779
  %v790 = vpop.f32.mrf.mxu0
  %v791 = vadd.f32 %v605, %v790
  %v792 = vpop.f32.mrf.mxu0
  %793 = vdwg.mxu0
  %v794 = vxor.u32 %v791, 2147483648
  %v795 = vmul.f32 %v794, 1.442695
  %v796 = vpow.pop %v795
  %v797 = vadd.f32 %v796, 1.0
  %v798 = vrcp.pop %v797
  %v799 = vmul.f32 %v797, %v798
  %v800 = vsub.f32 1.0, %v799
  %v801 = vmul.f32 %v798, %v800
  %v802 = vadd.f32 %v798, %v801
  %vm803 = vweird.f32 %v797
  %vm804 = vweird.f32 %v798
  %vm805 = vmor %vm803, %vm804
  %v806 = vsel %vm805, %v798, %v802
  %v807 = vand.u32 2147483647, %v797
  %vm808 = vcmp.eq.f32.partialorder %v807, 8.507059e+37
  %v809 = vand.u32 %v797, 2147483648
  %v810 = vor.u32 1.1754944e-38, %v809
  %v811 = vsel %vm808, %v810, %v806
  %v812 = vmul.f32 1.0, %v811
  %v813 = vtanh.pop %v791
  %815 = vrot.lane.b32.xlu0 %v813, 64
  %v816 = vpop.permute.xlu0 %815
  %v818 = vmul.f32 %v812, %v816
  %v819 = vtanh.pop %v818
  %821 = vrot.lane.b32.xlu0 %v819, 96
  %v822 = vpop.permute.xlu0 %821
  %v824 = vmul.f32 %v812, %v822
  %826 = vrot.lane.b32.xlu0 %v824, 32
  %v827 = vpop.permute.xlu0 %826
  %829 = vst.msk [vmem:[#allocation2 + $0x50] sm:$0xff] %vm161, %v827
  %v830 = vld [vmem:[#allocation2] sm:$0xff]
  %v831 = vld [vmem:[#allocation2 + $0x8] sm:$0xff]
  %v832 = vld [vmem:[#allocation2 + $0x10] sm:$0xff]
  %v833 = vld [vmem:[#allocation2 + $0x18] sm:$0xff]
  %v834 = vld [vmem:[#allocation2 + $0x20] sm:$0xff]
  %v835 = vld [vmem:[#allocation2 + $0x28] sm:$0xff]
  %v836 = vld [vmem:[#allocation2 + $0x30] sm:$0xff]
  %v837 = vld [vmem:[#allocation2 + $0x38] sm:$0xff]
  %v838 = vld [vmem:[#allocation2 + $0x40] sm:$0xff]
  %v839 = vld [vmem:[#allocation2 + $0x48] sm:$0xff]
  %v840 = vld [vmem:[#allocation2 + $0x50] sm:$0xff]
  %v841 = vld [vmem:[%s6] sm:$0xff]
  %v842 = vld [vmem:[%s6 + $0x8] sm:$0xff]
  %v843 = vld [vmem:[%s6 + $0x10] sm:$0xff]
  %v844 = vld [vmem:[%s6 + $0x18] sm:$0xff]
  %v845 = vld [vmem:[%s7] sm:$0x1]
  %v847 = vperm.slane %v845, 0
  %v850 = vsel %vm161, %v830, 0
  %v853 = vsel %vm161, %v831, 0
  %v856 = vsel %vm161, %v832, 0
  %v859 = vsel %vm161, %v833, 0
  %v862 = vsel %vm161, %v834, 0
  %v865 = vsel %vm161, %v835, 0
  %v868 = vsel %vm161, %v836, 0
  %v871 = vsel %vm161, %v837, 0
  %v874 = vsel %vm161, %v838, 0
  %v877 = vsel %vm161, %v839, 0
  %v880 = vsel %vm161, %v840, 0
  %882 = vmatpush.msra.mxu0 0.0
  %883 = vmatpush.msra.mxu0 0.0
  %884 = vmatpush.msra.mxu0 0.0
  %885 = vmatpush.msra.mxu0 0.0
  %886 = vmatpush.msra.mxu0 0.0
  %887 = vmatpush.msra.mxu0 0.0
  %888 = vmatpush.msra.mxu0 0.0
  %889 = vmatpush.msra.mxu0 0.0
  %890 = vmatpush.msra.mxu0 0.0
  %891 = vmatpush.msra.mxu0 0.0
  %892 = vmatpush.msra.mxu0 0.0
  %893 = vmatpush.msra.mxu0 0.0
  %894 = vmatpush.msra.mxu0 %v844
  %895 = vmatpush.msra.mxu0 %v843
  %896 = vmatpush.msra.mxu0 %v842
  %897 = vmatpush.msra.mxu0 %v841
  %898 = vmatmul.f32.gmra.mxu0 %v850
  %v899 = vpop.f32.mrf.mxu0
  %v900 = vadd.f32 %v847, %v899
  %901 = vmatmul.f32.gmra.mxu0 %v853
  %v902 = vpop.f32.mrf.mxu0
  %v903 = vadd.f32 %v847, %v902
  %904 = vmatmul.f32.gmra.mxu0 %v856
  %v905 = vpop.f32.mrf.mxu0
  %v906 = vadd.f32 %v847, %v905
  %907 = vmatmul.f32.gmra.mxu0 %v859
  %v908 = vpop.f32.mrf.mxu0
  %v909 = vadd.f32 %v847, %v908
  %910 = vmatmul.f32.gmra.mxu0 %v862
  %v911 = vpop.f32.mrf.mxu0
  %v912 = vadd.f32 %v847, %v911
  %913 = vmatmul.f32.gmra.mxu0 %v865
  %v914 = vpop.f32.mrf.mxu0
  %v915 = vadd.f32 %v847, %v914
  %916 = vmatmul.f32.gmra.mxu0 %v868
  %v917 = vpop.f32.mrf.mxu0
  %v918 = vadd.f32 %v847, %v917
  %919 = vmatmul.f32.gmra.mxu0 %v871
  %v920 = vpop.f32.mrf.mxu0
  %v921 = vadd.f32 %v847, %v920
  %922 = vmatmul.f32.gmra.mxu0 %v874
  %v923 = vpop.f32.mrf.mxu0
  %v924 = vadd.f32 %v847, %v923
  %925 = vmatmul.f32.gmra.mxu0 %v877
  %v926 = vpop.f32.mrf.mxu0
  %v927 = vadd.f32 %v847, %v926
  %928 = vmatmul.f32.gmra.mxu0 %v880
  %v929 = vpop.f32.mrf.mxu0
  %v930 = vadd.f32 %v847, %v929
  %931 = vdwg.mxu0
  %932 = vst.msk [vmem:[%s8] sm:$0xff] %vm56, %v900
  %933 = vst.msk [vmem:[%s8 + $0x8] sm:$0xff] %vm56, %v903
  %934 = vst.msk [vmem:[%s8 + $0x10] sm:$0xff] %vm56, %v906
  %935 = vst.msk [vmem:[%s8 + $0x18] sm:$0xff] %vm56, %v909
  %936 = vst.msk [vmem:[%s8 + $0x20] sm:$0xff] %vm56, %v912
  %937 = vst.msk [vmem:[%s8 + $0x28] sm:$0xff] %vm56, %v915
  %938 = vst.msk [vmem:[%s8 + $0x30] sm:$0xff] %vm56, %v918
  %939 = vst.msk [vmem:[%s8 + $0x38] sm:$0xff] %vm56, %v921
  %940 = vst.msk [vmem:[%s8 + $0x40] sm:$0xff] %vm56, %v924
  %941 = vst.msk [vmem:[%s8 + $0x48] sm:$0xff] %vm56, %v927
  %942 = vst.msk [vmem:[%s8 + $0x50] sm:$0xff] %vm56, %v930
  // Predicated region
  $region34: #{model_forward.1} parent=0 // pred_check
    _
  $region35: #{model_forward.1} parent=0 // pred_check_branch
    %944 = sbr.rel (0) target = $region37
  $region36: #{model_forward.1} parent=0 // pred_region
    _
  $region37: #{model_forward.1} parent=0 // pred_fallthru
    _
  // Predicated region
  $region38: #{model_forward.1} parent=0 // pred_check
    _
  $region39: #{model_forward.1} parent=0 // pred_check_branch
    %946 = sbr.rel (0) target = $region41
  $region40: #{model_forward.1} parent=0 // pred_region
    _
  $region41: #{model_forward.1} parent=0 // pred_fallthru
    _

</llo_original>
